<compile_context>
chip_gen: v5e
topology: v5e:2x2
jax: 0.10.0
libtpu: 0.0.40
codegen_flags: <defaults>
</compile_context>

<pallas_src>
import functools

import jax
import jax.numpy as jnp
from jax import lax
from jax.experimental import pallas as pl
from jax.experimental.pallas import tpu as pltpu

# loss hyper-parameters (from mcif_loss_v2.__init__)
SDF_LAMBDA = 1.0
DIST_LAMBDA = 1.0
LATENT_LAMBDA = 0.0
NORMAL_LAMBDA = 0.001
GRAD_LAMBDA = 0.0005
COS_EPS = 1e-8  # torch.nn.functional.cosine_similarity default eps
LANE = 128


def _mcif_loss_kernel(slab_ref, latent_ref, out_ref, *,
                      n_mf, n_nmf, n_pad, n_lat):
    # static ref views of the packed lane-dense slab: each row is (1, n_pad)
    def row(r):
        return slab_ref[r:r + 1, :].astype(jnp.float32)

    pred_mf = row(0)
    gx, gy, gz = row(1), row(2), row(3)        # mf_grad
    nx, ny, nz = row(4), row(5), row(6)        # mf_norm
    pred_nmf = row(7)
    hx, hy, hz = row(8), row(9), row(10)       # nmf_grad
    nmf_dist = row(11)

    inv_mf = 1.0 / n_mf
    inv_nmf = 1.0 / n_nmf

    # lane masks only if the point counts were padded up to the lane multiple
    if n_pad != n_mf:
        mf_mask = lax.broadcasted_iota(jnp.int32, (1, n_pad), 1) < n_mf
    else:
        mf_mask = None
    if n_pad != n_nmf:
        nmf_mask = lax.broadcasted_iota(jnp.int32, (1, n_pad), 1) < n_nmf
    else:
        nmf_mask = None

    # mf_loss = pred_mf_sdf.abs().mean()        (zero padding contributes 0)
    mf_loss = jnp.sum(jnp.abs(pred_mf)) * inv_mf

    # normals_loss_dist = (mf_grad - mf_norm).abs().norm(2, dim=-1).mean()
    # (abs before squaring is redundant; sqrt(0)=0 for padded lanes)
    dx, dy, dz = gx - nx, gy - ny, gz - nz
    normals_loss_dist = jnp.sum(jnp.sqrt(dx * dx + dy * dy + dz * dz)) * inv_mf

    # normals_loss = (1 - cosine_similarity(mf_grad, mf_norm, dim=-1)).mean()
    dot = gx * nx + gy * ny + gz * nz
    gg = gx * gx + gy * gy + gz * gz
    nn = nx * nx + ny * ny + nz * nz
    cos = dot * lax.rsqrt(jnp.maximum(gg * nn, COS_EPS * COS_EPS))
    one_m_cos = 1.0 - cos
    if mf_mask is not None:
        one_m_cos = jnp.where(mf_mask, one_m_cos, 0.0)
    normals_loss = jnp.sum(one_m_cos) * inv_mf

    # grad_loss = ((nmf_grad.norm(2, dim=-1) - 1) ** 2).mean()
    gnorm = jnp.sqrt(hx * hx + hy * hy + hz * hz)
    gerr = (gnorm - 1.0) ** 2
    if nmf_mask is not None:
        gerr = jnp.where(nmf_mask, gerr, 0.0)
    grad_loss = jnp.sum(gerr) * inv_nmf

    # dist_loss = |pred_nmf_sdf.abs() - nmf_dist|.mean()   (padding -> |0-0| = 0)
    dist_loss = jnp.sum(jnp.abs(jnp.abs(pred_nmf) - nmf_dist)) * inv_nmf

    # latent_loss = sdf_latent.norm(dim=-1, p=2).mean()
    latent = latent_ref[...].astype(jnp.float32)             # (B, L), tiny
    latent_loss = jnp.sum(
        jnp.sqrt(jnp.sum(latent * latent, axis=-1, keepdims=True))) / n_lat

    loss_total = (mf_loss * SDF_LAMBDA
                  + dist_loss * DIST_LAMBDA
                  + normals_loss * NORMAL_LAMBDA
                  + grad_loss * GRAD_LAMBDA
                  + latent_loss * LATENT_LAMBDA)

    # epilogue: grouped scalar writes to SMEM
    out_ref[0] = loss_total
    out_ref[1] = mf_loss            # sdf_term
    out_ref[2] = dist_loss          # dist_term
    out_ref[3] = latent_loss        # latent_term
    out_ref[4] = normals_loss       # normal_term
    out_ref[5] = normals_loss_dist  # normal_dist_term
    out_ref[6] = grad_loss          # grad_term
    out_ref[7] = jnp.float32(0.0)


@jax.jit
def mcif_loss_v2(pred_mf_sdf, mf_grad, mf_norm,
                 pred_nmf_sdf, nmf_grad, nmf_dist, sdf_latent):
    """Returns (loss_total, dict of scalar terms)."""
    n_mf = pred_mf_sdf.shape[0]
    n_nmf = pred_nmf_sdf.shape[0]
    n_lat = sdf_latent.shape[0]
    n_pad = LANE * ((max(n_mf, n_nmf) + LANE - 1) // LANE)

    def lane_rows(x, n):
        # (n, c) -> (c, n_pad) lane-dense, zero-padded on the lane axis
        xt = jnp.transpose(x.astype(jnp.float32))
        return jnp.pad(xt, ((0, 0), (0, n_pad - n)))

    slab = jnp.concatenate([
        lane_rows(pred_mf_sdf, n_mf),     # row 0
        lane_rows(mf_grad, n_mf),         # rows 1..3
        lane_rows(mf_norm, n_mf),         # rows 4..6
        lane_rows(pred_nmf_sdf, n_nmf),   # row 7
        lane_rows(nmf_grad, n_nmf),       # rows 8..10
        lane_rows(nmf_dist, n_nmf),       # row 11
    ], axis=0)                            # (12, n_pad) f32

    kernel = functools.partial(_mcif_loss_kernel, n_mf=n_mf, n_nmf=n_nmf,
                               n_pad=n_pad, n_lat=n_lat)
    vmem = pl.BlockSpec(memory_space=pltpu.MemorySpace.VMEM)
    out = pl.pallas_call(
        kernel,
        out_shape=jax.ShapeDtypeStruct((8,), jnp.float32),
        in_specs=[vmem, vmem],
        out_specs=pl.BlockSpec(memory_space=pltpu.MemorySpace.SMEM),
    )(slab, sdf_latent.astype(jnp.float32))

    terms = {
        'sdf_term': out[1],
        'dist_term': out[2],
        'latent_term': out[3],
        'normal_term': out[4],
        'normal_dist_term': out[5],
        'grad_term': out[6],
    }
    return out[0], terms


# ---------------- plain-JAX glue: synthetic SDF network + autograd ----------
def init_sdf_mlp(key, hidden=32):
    k1, k2 = jax.random.split(key)
    w1 = jax.random.normal(k1, (3, hidden), jnp.float32) * 0.5
    b1 = jnp.zeros((hidden,), jnp.float32)
    w2 = jax.random.normal(k2, (hidden, 1), jnp.float32) * 0.5
    b2 = jnp.zeros((1,), jnp.float32)
    return (w1, b1, w2, b2)


def sdf_net(params, pnts):  # pnts: (N, 3) -> (N, 1)
    w1, b1, w2, b2 = params
    h = jnp.tanh(pnts @ w1 + b1)
    return h @ w2 + b2


def sdf_point_grad(params, pnts):  # d sdf / d point, (N, 3)
    def scalar_sdf(p):
        return sdf_net(params, p[None, :])[0, 0]
    return jax.vmap(jax.grad(scalar_sdf))(pnts)


# ---------------- pure-JAX reference for verification ----------------------
def loss_ref(pred_mf, mf_grad, mf_norm, pred_nmf, nmf_grad, nmf_dist, latent):
    mf_loss = jnp.mean(jnp.abs(pred_mf))
    diff = mf_grad - mf_norm
    normals_loss_dist = jnp.mean(jnp.sqrt(jnp.sum(diff * diff, axis=-1)))
    dot = jnp.sum(mf_grad * mf_norm, axis=-1)
    cos = dot / jnp.maximum(
        jnp.linalg.norm(mf_grad, axis=-1) * jnp.linalg.norm(mf_norm, axis=-1),
        COS_EPS)
    normals_loss = jnp.mean(1.0 - cos)
    grad_loss = jnp.mean((jnp.linalg.norm(nmf_grad, axis=-1) - 1.0) ** 2)
    dist_loss = jnp.mean(jnp.abs(jnp.abs(pred_nmf) - nmf_dist))
    latent_loss = jnp.mean(jnp.linalg.norm(latent, axis=-1))
    total = (mf_loss * SDF_LAMBDA + dist_loss * DIST_LAMBDA
             + normals_loss * NORMAL_LAMBDA + grad_loss * GRAD_LAMBDA
             + latent_loss * LATENT_LAMBDA)
    terms = {
        'sdf_term': mf_loss, 'dist_term': dist_loss, 'latent_term': latent_loss,
        'normal_term': normals_loss, 'normal_dist_term': normals_loss_dist,
        'grad_term': grad_loss,
    }
    return total, terms


if __name__ == "__main__":
    key = jax.random.PRNGKey(0)
    k_mf, k_nmf, k_norm, k_dist, k_lat, k_net = jax.random.split(key, 6)

    # N != M exercises the lane-padding/mask path (M=96 pads to 128 lanes).
    N, M, B, L = 128, 96, 8, 32

    mf_pnts = jax.random.normal(k_mf, (N, 3), jnp.float32)
    nmf_pnts = jax.random.normal(k_nmf, (M, 3), jnp.float32)
    mf_norm = jax.random.normal(k_norm, (N, 3), jnp.float32)
    mf_norm = mf_norm / jnp.linalg.norm(mf_norm, axis=-1, keepdims=True)
    nmf_dist = jnp.abs(jax.random.normal(k_dist, (M, 1), jnp.float32))
    sdf_latent = jax.random.normal(k_lat, (B, L), jnp.float32)

    params = init_sdf_mlp(k_net, hidden=32)
    pred_mf_sdf = sdf_net(params, mf_pnts)        # (N, 1)
    pred_nmf_sdf = sdf_net(params, nmf_pnts)      # (M, 1)
    mf_grad = sdf_point_grad(params, mf_pnts)     # (N, 3)  = gradient(mf_pnts, pred_mf_sdf)
    nmf_grad = sdf_point_grad(params, nmf_pnts)   # (M, 3)  = gradient(nmf_pnts, pred_nmf_sdf)

    loss_total, terms = mcif_loss_v2(
        pred_mf_sdf, mf_grad, mf_norm, pred_nmf_sdf, nmf_grad, nmf_dist,
        sdf_latent)
    jax.block_until_ready(loss_total)

    # verify against a pure-JAX reference
    ref_total, ref_terms = loss_ref(pred_mf_sdf, mf_grad, mf_norm,
                                    pred_nmf_sdf, nmf_grad, nmf_dist,
                                    sdf_latent)
    assert jnp.allclose(loss_total, ref_total, rtol=1e-5, atol=1e-6), (
        loss_total, ref_total)
    assert jnp.allclose(terms['normal_dist_term'], ref_terms['normal_dist_term'],
                        rtol=1e-5, atol=1e-6)
    for k in ref_terms:
        assert jnp.allclose(terms[k], ref_terms[k], rtol=1e-4, atol=1e-6), (
            k, terms[k], ref_terms[k])

    print("KERNEL_OK")
</pallas_src>

<mosaic_0001>
module attributes {stable_mosaic.version = 11 : i64} {
  func.func @_mcif_loss_kernel(%arg0: memref<12x128xf32, #tpu.memory_space<vmem>>, %arg1: memref<8x32xf32, #tpu.memory_space<vmem>>, %arg2: memref<8xf32, #tpu.memory_space<smem>>) attributes {dimension_semantics = [], scalar_prefetch = 0 : i64, scratch_operands = 0 : i64, tpu.core_type = #tpu.core_type<tc>} {
    %c0 = arith.constant 0 : index
    %c0_0 = arith.constant 0 : index
    %0 = vector.load %arg0[%c0, %c0_0] : memref<12x128xf32, #tpu.memory_space<vmem>>, vector<1x128xf32>
    %c1 = arith.constant 1 : index
    %c0_1 = arith.constant 0 : index
    %1 = vector.load %arg0[%c1, %c0_1] : memref<12x128xf32, #tpu.memory_space<vmem>>, vector<1x128xf32>
    %c2 = arith.constant 2 : index
    %c0_2 = arith.constant 0 : index
    %2 = vector.load %arg0[%c2, %c0_2] : memref<12x128xf32, #tpu.memory_space<vmem>>, vector<1x128xf32>
    %c3 = arith.constant 3 : index
    %c0_3 = arith.constant 0 : index
    %3 = vector.load %arg0[%c3, %c0_3] : memref<12x128xf32, #tpu.memory_space<vmem>>, vector<1x128xf32>
    %c4 = arith.constant 4 : index
    %c0_4 = arith.constant 0 : index
    %4 = vector.load %arg0[%c4, %c0_4] : memref<12x128xf32, #tpu.memory_space<vmem>>, vector<1x128xf32>
    %c5 = arith.constant 5 : index
    %c0_5 = arith.constant 0 : index
    %5 = vector.load %arg0[%c5, %c0_5] : memref<12x128xf32, #tpu.memory_space<vmem>>, vector<1x128xf32>
    %c6 = arith.constant 6 : index
    %c0_6 = arith.constant 0 : index
    %6 = vector.load %arg0[%c6, %c0_6] : memref<12x128xf32, #tpu.memory_space<vmem>>, vector<1x128xf32>
    %c7 = arith.constant 7 : index
    %c0_7 = arith.constant 0 : index
    %7 = vector.load %arg0[%c7, %c0_7] : memref<12x128xf32, #tpu.memory_space<vmem>>, vector<1x128xf32>
    %c8 = arith.constant 8 : index
    %c0_8 = arith.constant 0 : index
    %8 = vector.load %arg0[%c8, %c0_8] : memref<12x128xf32, #tpu.memory_space<vmem>>, vector<1x128xf32>
    %c9 = arith.constant 9 : index
    %c0_9 = arith.constant 0 : index
    %9 = vector.load %arg0[%c9, %c0_9] : memref<12x128xf32, #tpu.memory_space<vmem>>, vector<1x128xf32>
    %c10 = arith.constant 10 : index
    %c0_10 = arith.constant 0 : index
    %10 = vector.load %arg0[%c10, %c0_10] : memref<12x128xf32, #tpu.memory_space<vmem>>, vector<1x128xf32>
    %c11 = arith.constant 11 : index
    %c0_11 = arith.constant 0 : index
    %11 = vector.load %arg0[%c11, %c0_11] : memref<12x128xf32, #tpu.memory_space<vmem>>, vector<1x128xf32>
    %12 = tpu.iota {dimensions = array<i32: 1>} : vector<1x128xi32>
    %c96_i32 = arith.constant 96 : i32
    %13 = vector.broadcast %c96_i32 : i32 to vector<1x128xi32>
    %14 = arith.cmpi slt, %12, %13 : vector<1x128xi32>
    %15 = math.absf %0 : vector<1x128xf32>
    %16 = vector.shape_cast %15 : vector<1x128xf32> to vector<1x1x128xf32>
    %cst = arith.constant dense<0.000000e+00> : vector<1xf32>
    %17 = vector.multi_reduction <add>, %16, %cst [1, 2] : vector<1x1x128xf32> to vector<1xf32>
    %18 = vector.shape_cast %17 : vector<1xf32> to vector<1x1x1xf32>
    %19 = vector.extract %18[0, 0, 0] : f32 from vector<1x1x1xf32>
    %cst_12 = arith.constant 7.812500e-03 : f32
    %20 = arith.mulf %19, %cst_12 : f32
    %21 = arith.subf %1, %4 : vector<1x128xf32>
    %22 = arith.subf %2, %5 : vector<1x128xf32>
    %23 = arith.subf %3, %6 : vector<1x128xf32>
    %24 = arith.mulf %21, %21 : vector<1x128xf32>
    %25 = arith.mulf %22, %22 : vector<1x128xf32>
    %26 = arith.addf %24, %25 : vector<1x128xf32>
    %27 = arith.mulf %23, %23 : vector<1x128xf32>
    %28 = arith.addf %26, %27 : vector<1x128xf32>
    %29 = math.sqrt %28 : vector<1x128xf32>
    %30 = vector.shape_cast %29 : vector<1x128xf32> to vector<1x1x128xf32>
    %cst_13 = arith.constant dense<0.000000e+00> : vector<1xf32>
    %31 = vector.multi_reduction <add>, %30, %cst_13 [1, 2] : vector<1x1x128xf32> to vector<1xf32>
    %32 = vector.shape_cast %31 : vector<1xf32> to vector<1x1x1xf32>
    %33 = vector.extract %32[0, 0, 0] : f32 from vector<1x1x1xf32>
    %cst_14 = arith.constant 7.812500e-03 : f32
    %34 = arith.mulf %33, %cst_14 : f32
    %35 = arith.mulf %1, %4 : vector<1x128xf32>
    %36 = arith.mulf %2, %5 : vector<1x128xf32>
    %37 = arith.addf %35, %36 : vector<1x128xf32>
    %38 = arith.mulf %3, %6 : vector<1x128xf32>
    %39 = arith.addf %37, %38 : vector<1x128xf32>
    %40 = arith.mulf %1, %1 : vector<1x128xf32>
    %41 = arith.mulf %2, %2 : vector<1x128xf32>
    %42 = arith.addf %40, %41 : vector<1x128xf32>
    %43 = arith.mulf %3, %3 : vector<1x128xf32>
    %44 = arith.addf %42, %43 : vector<1x128xf32>
    %45 = arith.mulf %4, %4 : vector<1x128xf32>
    %46 = arith.mulf %5, %5 : vector<1x128xf32>
    %47 = arith.addf %45, %46 : vector<1x128xf32>
    %48 = arith.mulf %6, %6 : vector<1x128xf32>
    %49 = arith.addf %47, %48 : vector<1x128xf32>
    %50 = arith.mulf %44, %49 : vector<1x128xf32>
    %cst_15 = arith.constant 1.000000e-16 : f32
    %51 = vector.broadcast %cst_15 : f32 to vector<1x128xf32>
    %52 = arith.maximumf %50, %51 : vector<1x128xf32>
    %53 = math.rsqrt %52 : vector<1x128xf32>
    %54 = arith.mulf %39, %53 : vector<1x128xf32>
    %cst_16 = arith.constant 1.000000e+00 : f32
    %55 = vector.broadcast %cst_16 : f32 to vector<1x128xf32>
    %56 = arith.subf %55, %54 : vector<1x128xf32>
    %57 = vector.shape_cast %56 : vector<1x128xf32> to vector<1x1x128xf32>
    %cst_17 = arith.constant dense<0.000000e+00> : vector<1xf32>
    %58 = vector.multi_reduction <add>, %57, %cst_17 [1, 2] : vector<1x1x128xf32> to vector<1xf32>
    %59 = vector.shape_cast %58 : vector<1xf32> to vector<1x1x1xf32>
    %60 = vector.extract %59[0, 0, 0] : f32 from vector<1x1x1xf32>
    %cst_18 = arith.constant 7.812500e-03 : f32
    %61 = arith.mulf %60, %cst_18 : f32
    %62 = arith.mulf %8, %8 : vector<1x128xf32>
    %63 = arith.mulf %9, %9 : vector<1x128xf32>
    %64 = arith.addf %62, %63 : vector<1x128xf32>
    %65 = arith.mulf %10, %10 : vector<1x128xf32>
    %66 = arith.addf %64, %65 : vector<1x128xf32>
    %67 = math.sqrt %66 : vector<1x128xf32>
    %cst_19 = arith.constant 1.000000e+00 : f32
    %68 = vector.broadcast %cst_19 : f32 to vector<1x128xf32>
    %69 = arith.subf %67, %68 : vector<1x128xf32>
    %70 = arith.mulf %69, %69 : vector<1x128xf32>
    %cst_20 = arith.constant 0.000000e+00 : f32
    %71 = vector.broadcast %cst_20 : f32 to vector<1x128xf32>
    %72 = arith.select %14, %70, %71 : vector<1x128xi1>, vector<1x128xf32>
    %73 = vector.shape_cast %72 : vector<1x128xf32> to vector<1x1x128xf32>
    %cst_21 = arith.constant dense<0.000000e+00> : vector<1xf32>
    %74 = vector.multi_reduction <add>, %73, %cst_21 [1, 2] : vector<1x1x128xf32> to vector<1xf32>
    %75 = vector.shape_cast %74 : vector<1xf32> to vector<1x1x1xf32>
    %76 = vector.extract %75[0, 0, 0] : f32 from vector<1x1x1xf32>
    %cst_22 = arith.constant 0.010416667 : f32
    %77 = arith.mulf %76, %cst_22 : f32
    %78 = math.absf %7 : vector<1x128xf32>
    %79 = arith.subf %78, %11 : vector<1x128xf32>
    %80 = math.absf %79 : vector<1x128xf32>
    %81 = vector.shape_cast %80 : vector<1x128xf32> to vector<1x1x128xf32>
    %cst_23 = arith.constant dense<0.000000e+00> : vector<1xf32>
    %82 = vector.multi_reduction <add>, %81, %cst_23 [1, 2] : vector<1x1x128xf32> to vector<1xf32>
    %83 = vector.shape_cast %82 : vector<1xf32> to vector<1x1x1xf32>
    %84 = vector.extract %83[0, 0, 0] : f32 from vector<1x1x1xf32>
    %cst_24 = arith.constant 0.010416667 : f32
    %85 = arith.mulf %84, %cst_24 : f32
    %c0_25 = arith.constant 0 : index
    %c0_26 = arith.constant 0 : index
    %86 = vector.load %arg1[%c0_25, %c0_26] : memref<8x32xf32, #tpu.memory_space<vmem>>, vector<8x32xf32>
    %87 = arith.mulf %86, %86 : vector<8x32xf32>
    %cst_27 = arith.constant dense<0.000000e+00> : vector<8xf32>
    %88 = vector.multi_reduction <add>, %87, %cst_27 [1] : vector<8x32xf32> to vector<8xf32>
    %89 = vector.shape_cast %88 : vector<8xf32> to vector<8x1xf32>
    %90 = math.sqrt %89 : vector<8x1xf32>
    %91 = vector.shape_cast %90 : vector<8x1xf32> to vector<1x8x1xf32>
    %cst_28 = arith.constant dense<0.000000e+00> : vector<1xf32>
    %92 = vector.multi_reduction <add>, %91, %cst_28 [1, 2] : vector<1x8x1xf32> to vector<1xf32>
    %93 = vector.shape_cast %92 : vector<1xf32> to vector<1x1x1xf32>
    %94 = vector.extract %93[0, 0, 0] : f32 from vector<1x1x1xf32>
    %cst_29 = arith.constant 8.000000e+00 : f32
    %95 = arith.divf %94, %cst_29 : f32
    %cst_30 = arith.constant 1.000000e+00 : f32
    %96 = arith.mulf %20, %cst_30 : f32
    %cst_31 = arith.constant 1.000000e+00 : f32
    %97 = arith.mulf %85, %cst_31 : f32
    %98 = arith.addf %96, %97 : f32
    %cst_32 = arith.constant 1.000000e-03 : f32
    %99 = arith.mulf %61, %cst_32 : f32
    %100 = arith.addf %98, %99 : f32
    %cst_33 = arith.constant 5.000000e-04 : f32
    %101 = arith.mulf %77, %cst_33 : f32
    %102 = arith.addf %100, %101 : f32
    %cst_34 = arith.constant 0.000000e+00 : f32
    %103 = arith.mulf %95, %cst_34 : f32
    %104 = arith.addf %102, %103 : f32
    %c0_35 = arith.constant 0 : index
    %105 = memref.load %arg2[%c0_35] : memref<8xf32, #tpu.memory_space<smem>>
    memref.store %104, %arg2[%c0_35] : memref<8xf32, #tpu.memory_space<smem>>
    %c1_36 = arith.constant 1 : index
    %106 = memref.load %arg2[%c1_36] : memref<8xf32, #tpu.memory_space<smem>>
    memref.store %20, %arg2[%c1_36] : memref<8xf32, #tpu.memory_space<smem>>
    %c2_37 = arith.constant 2 : index
    %107 = memref.load %arg2[%c2_37] : memref<8xf32, #tpu.memory_space<smem>>
    memref.store %85, %arg2[%c2_37] : memref<8xf32, #tpu.memory_space<smem>>
    %c3_38 = arith.constant 3 : index
    %108 = memref.load %arg2[%c3_38] : memref<8xf32, #tpu.memory_space<smem>>
    memref.store %95, %arg2[%c3_38] : memref<8xf32, #tpu.memory_space<smem>>
    %c4_39 = arith.constant 4 : index
    %109 = memref.load %arg2[%c4_39] : memref<8xf32, #tpu.memory_space<smem>>
    memref.store %61, %arg2[%c4_39] : memref<8xf32, #tpu.memory_space<smem>>
    %c5_40 = arith.constant 5 : index
    %110 = memref.load %arg2[%c5_40] : memref<8xf32, #tpu.memory_space<smem>>
    memref.store %34, %arg2[%c5_40] : memref<8xf32, #tpu.memory_space<smem>>
    %c6_41 = arith.constant 6 : index
    %111 = memref.load %arg2[%c6_41] : memref<8xf32, #tpu.memory_space<smem>>
    memref.store %77, %arg2[%c6_41] : memref<8xf32, #tpu.memory_space<smem>>
    %cst_42 = arith.constant 0.000000e+00 : f32
    %c7_43 = arith.constant 7 : index
    %112 = memref.load %arg2[%c7_43] : memref<8xf32, #tpu.memory_space<smem>>
    memref.store %cst_42, %arg2[%c7_43] : memref<8xf32, #tpu.memory_space<smem>>
    return
  }
}

</mosaic_0001>

<llo_original>
// kernel: mcif_loss_v2.1
$region0: #{mcif_loss_v2.1}
  #allocation0 [shape = 'u32[]', space=smem, size = 0x4, offset = 0x4, fixed_abs, tag = 'smem constant byte address 0x4 - core index']
  #allocation1 [shape = 'u32[72,128]{1,0:T(1,128)}', space=vmem, size = 0x9000, scoped, tag = 'internal scratch']
  %s0 = inlined_call_operand.vmem [shape: f32[12,128], index: 0, kind: input, shape index: {}]
  %s1 = inlined_call_operand.vmem [shape: f32[8,32], index: 1, kind: input, shape index: {}]
  %s2 = inlined_call_operand.vmem [shape: f32[8], index: 2, kind: output, shape index: {}]
  %s3 = sld [smem:[#allocation0]]
  $region18: #{mcif_loss_v2.1} parent=0
    _
  %s5 = ssub.s32 1, %s3
  %s6 = scalar_select 0, %s5, %s3
  $region1: #{mcif_loss_v2.1} parent=0
    #allocation2 [shape = 'u8[512]{0}', space=smem, size = 0x200, scoped, tag = 'output window, operand 0, single buffered']
    #allocation3 [shape = 's32[1]{0}', space=sflag, size = 0x4, scoped, tag = 'scoped memory for mcif_loss_v2.1']
    %7 = vsyncpa [#allocation3], 0
    // Predicated region
    $region2: #{mcif_loss_v2.1} parent=1 // pred_check
      _
    $region3: #{mcif_loss_v2.1} parent=1 // pred_check_branch
      %9 = sbr.rel (0) target = $region5
    $region4: #{mcif_loss_v2.1} parent=1 // pred_region
      _
    $region5: #{mcif_loss_v2.1} parent=1 // pred_fallthru
      _
    // Predicated region
    $region6: #{mcif_loss_v2.1} parent=1 // pred_check
      _
    $region7: #{mcif_loss_v2.1} parent=1 // pred_check_branch
      %11 = sbr.rel (0) target = $region9
    $region8: #{mcif_loss_v2.1} parent=1 // pred_region
      _
    $region9: #{mcif_loss_v2.1} parent=1 // pred_fallthru
      _
    %v12 = vld [vmem:[%s0] sm:$0x1]
    %v13 = vld [vmem:[%s0 + $0x1] sm:$0x1]
    %v14 = vld [vmem:[%s0 + $0x2] sm:$0x1]
    %v15 = vld [vmem:[%s0 + $0x3] sm:$0x1]
    %v16 = vld [vmem:[%s0 + $0x4] sm:$0x1]
    %v17 = vld [vmem:[%s0 + $0x5] sm:$0x1]
    %v18 = vld [vmem:[%s0 + $0x6] sm:$0x1]
    %v19 = vld [vmem:[%s0 + $0x7] sm:$0x1]
    %v20 = vld [vmem:[%s0 + $0x8] sm:$0x1]
    %v21 = vld [vmem:[%s0 + $0x9] sm:$0x1]
    %v22 = vld [vmem:[%s0 + $0xa] sm:$0x1]
    %v23 = vld [vmem:[%s0 + $0xb] sm:$0x1]
    %v24 = vlaneseq
    %v25 = vand.u32 %v24, 127
    %vm26 = vcmp.lt.s32.totalorder %v25, 96
    %v27 = vand.u32 2147483647, %v12
    %vm28 = vcmask 1040384
    %v29 = vsel %vm28, %v27, 0.0
    %30 = vadd.xlane.f32.xlu0 %v29
    %v31 = vpop.xlane.xlu0 %30
    %v32 = vrot.slane %v31, 4
    %v33 = vadd.f32 %v31, %v32
    %v34 = vrot.slane %v33, 2
    %v35 = vadd.f32 %v33, %v34
    %v36 = vrot.slane %v35, 1
    %v37 = vadd.f32 %v35, %v36
    %s38 = vtos %v37
    %s39 = smul.f32 %s38, 0.0078125
    %v40 = vsub.f32 %v13, %v16
    %v41 = vsub.f32 %v14, %v17
    %v42 = vsub.f32 %v15, %v18
    %v43 = vmul.f32 %v40, %v40
    %v44 = vmul.f32 %v41, %v41
    %v45 = vadd.f32 %v43, %v44
    %v46 = vmul.f32 %v42, %v42
    %v47 = vadd.f32 %v45, %v46
    %v48 = vrsqrt.pop %v47
    %v49 = vmul.f32 %v48, %v47
    %v50 = vmul.f32 %v49, %v48
    %v51 = vmul.f32 0.5, %v50
    %v52 = vsub.f32 1.5, %v51
    %v53 = vmul.f32 %v48, %v52
    %v54 = vmul.f32 %v47, %v53
    %vm55 = vcmp.eq.f32.partialorder %v47, inf
    %v56 = vsel %vm55, %v47, %v54
    %vm57 = vcmp.eq.f32.partialorder %v47, 0.0
    %v58 = vand.u32 %v47, 2147483648
    %v59 = vsel %vm57, %v58, %v56
    %v60 = vsel %vm28, %v59, 0.0
    %61 = vadd.xlane.f32.xlu0 %v60
    %v62 = vpop.xlane.xlu0 %61
    %v63 = vrot.slane %v62, 4
    %v64 = vadd.f32 %v62, %v63
    %v65 = vrot.slane %v64, 2
    %v66 = vadd.f32 %v64, %v65
    %v67 = vrot.slane %v66, 1
    %v68 = vadd.f32 %v66, %v67
    %s69 = vtos %v68
    %s70 = smul.f32 %s69, 0.0078125
    %v71 = vmul.f32 %v13, %v16
    %v72 = vmul.f32 %v14, %v17
    %v73 = vadd.f32 %v71, %v72
    %v74 = vmul.f32 %v15, %v18
    %v75 = vadd.f32 %v73, %v74
    %v76 = vmul.f32 %v13, %v13
    %v77 = vmul.f32 %v14, %v14
    %v78 = vadd.f32 %v76, %v77
    %v79 = vmul.f32 %v15, %v15
    %v80 = vadd.f32 %v78, %v79
    %v81 = vmul.f32 %v16, %v16
    %v82 = vmul.f32 %v17, %v17
    %v83 = vadd.f32 %v81, %v82
    %v84 = vmul.f32 %v18, %v18
    %v85 = vadd.f32 %v83, %v84
    %v86 = vmul.f32 %v80, %v85
    %v87 = vmax.f32 %v86, 1e-16
    %v88 = vrsqrt.pop %v87
    %v89 = vmul.f32 %v88, %v87
    %v90 = vmul.f32 %v89, %v88
    %v91 = vmul.f32 0.5, %v90
    %v92 = vsub.f32 1.5, %v91
    %v93 = vmul.f32 %v88, %v92
    %vm94 = vweird.f32 %v87
    %vm95 = vweird.f32 %v88
    %vm96 = vmor %vm94, %vm95
    %v97 = vsel %vm96, %v88, %v93
    %v98 = vmul.f32 %v75, %v97
    %v99 = vsub.f32 1.0, %v98
    %v100 = vsel %vm28, %v99, 0.0
    %101 = vadd.xlane.f32.xlu0 %v100
    %v102 = vpop.xlane.xlu0 %101
    %v103 = vrot.slane %v102, 4
    %v104 = vadd.f32 %v102, %v103
    %v105 = vrot.slane %v104, 2
    %v106 = vadd.f32 %v104, %v105
    %v107 = vrot.slane %v106, 1
    %v108 = vadd.f32 %v106, %v107
    %s109 = vtos %v108
    %s110 = smul.f32 %s109, 0.0078125
    %v111 = vmul.f32 %v20, %v20
    %v112 = vmul.f32 %v21, %v21
    %v113 = vadd.f32 %v111, %v112
    %v114 = vmul.f32 %v22, %v22
    %v115 = vadd.f32 %v113, %v114
    %v116 = vrsqrt.pop %v115
    %v117 = vmul.f32 %v116, %v115
    %v118 = vmul.f32 %v117, %v116
    %v119 = vmul.f32 0.5, %v118
    %v120 = vsub.f32 1.5, %v119
    %v121 = vmul.f32 %v116, %v120
    %v122 = vmul.f32 %v115, %v121
    %vm123 = vcmp.eq.f32.partialorder %v115, inf
    %v124 = vsel %vm123, %v115, %v122
    %vm125 = vcmp.eq.f32.partialorder %v115, 0.0
    %v126 = vand.u32 %v115, 2147483648
    %v127 = vsel %vm125, %v126, %v124
    %v128 = vsub.f32 %v127, 1.0
    %v129 = vmul.f32 %v128, %v128
    %v130 = vsel %vm26, %v129, 0.0
    %v131 = vsel %vm28, %v130, 0.0
    %132 = vadd.xlane.f32.xlu0 %v131
    %v133 = vpop.xlane.xlu0 %132
    %v134 = vrot.slane %v133, 4
    %v135 = vadd.f32 %v133, %v134
    %v136 = vrot.slane %v135, 2
    %v137 = vadd.f32 %v135, %v136
    %v138 = vrot.slane %v137, 1
    %v139 = vadd.f32 %v137, %v138
    %s140 = vtos %v139
    %s141 = smul.f32 %s140, 0.010416667
    %v142 = vand.u32 2147483647, %v19
    %v143 = vsub.f32 %v142, %v23
    %v144 = vand.u32 2147483647, %v143
    %v145 = vsel %vm28, %v144, 0.0
    %146 = vadd.xlane.f32.xlu0 %v145
    %v147 = vpop.xlane.xlu0 %146
    %v148 = vrot.slane %v147, 4
    %v149 = vadd.f32 %v147, %v148
    %v150 = vrot.slane %v149, 2
    %v151 = vadd.f32 %v149, %v150
    %v152 = vrot.slane %v151, 1
    %v153 = vadd.f32 %v151, %v152
    %s154 = vtos %v153
    %s155 = smul.f32 %s154, 0.010416667
    %v156 = vld [vmem:[%s1] sm:$0xff]
    %v157 = vmul.f32 %v156, %v156
    %vm158 = vcmask 261120
    %v159 = vsel %vm158, %v157, 0.0
    %160 = vadd.xlane.f32.xlu0 %v159
    %v161 = vpop.xlane.xlu0 %160
    %v162 = vrsqrt.pop %v161
    %v163 = vmul.f32 %v162, %v161
    %v164 = vmul.f32 %v163, %v162
    %v165 = vmul.f32 0.5, %v164
    %v166 = vsub.f32 1.5, %v165
    %v167 = vmul.f32 %v162, %v166
    %v168 = vmul.f32 %v161, %v167
    %vm169 = vcmp.eq.f32.partialorder %v161, inf
    %v170 = vsel %vm169, %v161, %v168
    %vm171 = vcmp.eq.f32.partialorder %v161, 0.0
    %v172 = vand.u32 %v161, 2147483648
    %v173 = vsel %vm171, %v172, %v170
    %vm174 = vcmask 7168
    %v175 = vsel %vm174, %v173, 0.0
    %176 = vadd.xlane.f32.xlu0 %v175
    %v177 = vpop.xlane.xlu0 %176
    %v178 = vrot.slane %v177, 4
    %v179 = vadd.f32 %v177, %v178
    %v180 = vrot.slane %v179, 2
    %v181 = vadd.f32 %v179, %v180
    %v182 = vrot.slane %v181, 1
    %v183 = vadd.f32 %v181, %v182
    %s184 = vtos %v183
    %v185 = vrcp.pop 8.0
    %v186 = vmul.f32 8.0, %v185
    %v187 = vsub.f32 1.0, %v186
    %v188 = vmul.f32 %v185, %v187
    %v189 = vadd.f32 %v185, %v188
    %vm190 = vweird.f32 %v185
    %v191 = vsel %vm190, %v185, %v189
    %s192 = vtos %v191
    %s193 = smul.f32 %s184, %s192
    %s194 = sadd.f32 %s39, %s155
    %s195 = smul.f32 %s110, 0.001
    %s196 = sadd.f32 %s194, %s195
    %s197 = smul.f32 %s141, 0.0005
    %s198 = sadd.f32 %s196, %s197
    %s199 = smul.f32 %s193, 0.0
    %s200 = sadd.f32 %s198, %s199
    %s201 = scalar_lea.smem [#allocation2], 0
    %202 = sst [smem:[%s201]] %s200
    %s203 = scalar_lea.smem [#allocation2], 1
    %204 = sst [smem:[%s203]] %s39
    %s205 = scalar_lea.smem [#allocation2], 2
    %206 = sst [smem:[%s205]] %s155
    %s207 = scalar_lea.smem [#allocation2], 3
    %208 = sst [smem:[%s207]] %s193
    %s209 = scalar_lea.smem [#allocation2], 4
    %210 = sst [smem:[%s209]] %s110
    %s211 = scalar_lea.smem [#allocation2], 5
    %212 = sst [smem:[%s211]] %s70
    %s213 = scalar_lea.smem [#allocation2], 6
    %214 = sst [smem:[%s213]] %s141
    %s215 = scalar_lea.smem [#allocation2], 7
    %216 = sst [smem:[%s215]] 0.0
    // Predicated region
    $region10: #{mcif_loss_v2.1} parent=1 // pred_check
      _
    $region11: #{mcif_loss_v2.1} parent=1 // pred_check_branch
      %218 = sbr.rel (0) target = $region13
    $region12: #{mcif_loss_v2.1} parent=1 // pred_region
      %220 = vsyncadd [#allocation3], 0
      %s222 = sshll.u32 %s2, 4
      %s223 = int_to_ptr.vmem [resolvable:$true] %s222
      %225 = dma.smem_to_vmem [#allocation2], 16, %s223, [#allocation3]
    $region13: #{mcif_loss_v2.1} parent=1 // pred_fallthru
      _
    // Predicated region
    $region14: #{mcif_loss_v2.1} parent=1 // pred_check
      _
    $region15: #{mcif_loss_v2.1} parent=1 // pred_check_branch
      %227 = sbr.rel (0) target = $region17
    $region16: #{mcif_loss_v2.1} parent=1 // pred_region
      %229 = dma.done [#allocation3], 16
    $region17: #{mcif_loss_v2.1} parent=1 // pred_fallthru
      _
    %230 = sfence
    %231 = vsyncpa [#allocation3], 1

</llo_original>
